<compile_context>
chip_gen: v7x
topology: tpu7x:2x2x1
jax: 0.10.0
libtpu: 0.0.40
codegen_flags: <defaults>
</compile_context>

<pallas_src>
import functools

import jax
import jax.numpy as jnp
from jax import lax
from jax.experimental import pallas as pl
from jax.experimental.pallas import tpu as pltpu


def _fusion_kernel(img_ref, spa_ref, tmp_ref, w1_ref, b1_ref, w2_ref, out_ref,
                   *, tanh_bf16):
    img = img_ref[...]            # (BB, N, D) f32
    spa = spa_ref[...]            # (BB, N, D)
    tmp = tmp_ref[...]            # (BB, N, D)
    BB, N, D = img.shape
    H = w1_ref.shape[1]

    # Cosine similarity over the feature dim (torch.nn.CosineSimilarity(dim=1)).
    # Per-norm eps clamp; one EUP rsqrt per norm.
    eps = jnp.float32(1e-8)
    dots = jnp.sum(spa * img, axis=-1, keepdims=True)              # (BB, N, 1)
    ns2 = jnp.sum(spa * spa, axis=-1, keepdims=True)
    ni2 = jnp.sum(img * img, axis=-1, keepdims=True)
    sim = dots * (lax.rsqrt(jnp.maximum(ns2, eps * eps)) *
                  lax.rsqrt(jnp.maximum(ni2, eps * eps)))          # (BB, N, 1)

    z0 = sim * spa                 # weighted spatial feats (BB, N, D)
    z1 = tmp                       # temporal feats         (BB, N, D)

    # Two matmuls sharing the same RHS (w1 stays resident in the MXU);
    # bf16 operands, f32 accumulation.
    w1 = w1_ref[...].astype(jnp.bfloat16)                           # (D, H)
    b1 = b1_ref[...]                                                # (1, H) f32
    h0_pre = jnp.dot(z0.reshape(BB * N, D).astype(jnp.bfloat16), w1,
                     preferred_element_type=jnp.float32)            # (BB*N, H)
    h1_pre = jnp.dot(z1.reshape(BB * N, D).astype(jnp.bfloat16), w1,
                     preferred_element_type=jnp.float32)

    if tanh_bf16:
        # v6e/v7x: bf16 EUP tanh (double throughput), cast back to f32.
        h0 = jnp.tanh((h0_pre + b1).astype(jnp.bfloat16)).astype(jnp.float32)
        h1 = jnp.tanh((h1_pre + b1).astype(jnp.bfloat16)).astype(jnp.float32)
    else:
        # v5e: no bf16 EUP path, keep f32.
        h0 = jnp.tanh(h0_pre + b1)
        h1 = jnp.tanh(h1_pre + b1)

    # mean_N(h @ w2^T) == mean_N(h) @ w2^T: reduce over N first (XLU),
    # then a VPU multiply + lane-sum against the (1, H) w2 row.
    w2 = w2_ref[...]                                                # (1, H)
    h0_mean = jnp.mean(h0.reshape(BB, N, H), axis=1)                # (BB, H)
    h1_mean = jnp.mean(h1.reshape(BB, N, H), axis=1)
    s0 = jnp.sum(h0_mean * w2, axis=-1, keepdims=True)              # (BB, 1)
    s1 = jnp.sum(h1_mean * w2, axis=-1, keepdims=True)

    # Softmax over the 2-way "view" axis.
    m = jnp.maximum(s0, s1)
    e0 = jnp.exp(s0 - m)
    e1 = jnp.exp(s1 - m)
    inv = pl.reciprocal(e0 + e1, approx=True)
    beta0 = e0 * inv                                                # (BB, 1)
    beta1 = e1 * inv

    # Mean over N folded into per-view means (mean is linear in z).
    z0_mean = jnp.mean(z0, axis=1)                                  # (BB, D)
    z1_mean = jnp.mean(z1, axis=1)
    out_ref[...] = (beta0 * z0_mean + beta1 * z1_mean)[None]        # (1, BB, D)


def _device_kind():
    try:
        return jax.devices()[0].device_kind.lower()
    except Exception:
        return ""


def _choose_block_b(B, N, D, H, kind):
    """Largest divisor of B that fits the VMEM budget; 2-way split on v7x only
    when each half still yields >= 128 fused-matmul rows."""
    is_v7 = "v7" in kind
    budget = (20 << 20) if is_v7 else (48 << 20)   # leave headroom vs. 64/128 MiB

    def fits(bb):
        io = 2 * 3 * bb * N * D * 4                 # 3 inputs, double-buffered
        inter = bb * N * (2 * D + 2 * H) * 4        # z0/z1 + h0/h1 (f32)
        weights = (D * H + 2 * H) * 4
        return io + inter + weights <= budget

    bb = 1
    for d in range(B, 0, -1):
        if B % d == 0 and fits(d):
            bb = d
            break

    # v7x (2 TCs): split only when both halves carry >= 128 matmul rows.
    if is_v7 and B // bb < 2 and B % 2 == 0:
        half = B // 2
        if 2 * half * N >= 128 and fits(half):
            bb = half
    return bb


def dual_attn_fusion_pallas(img_feats, spatial_feats, temporal_feats,
                            w1, b1, w2_row, *, block_b=None):
    """w1: (D, H) = Linear(D,H).weight.T; b1: (1, H); w2_row: (1, H) = Linear(H,1).weight."""
    B, N, D = img_feats.shape
    H = w1.shape[1]

    kind = _device_kind()
    if block_b is None:
        block_b = _choose_block_b(B, N, D, H, kind)
    block_b = max(1, min(block_b, B))
    if B % block_b != 0:            # keep block_b a divisor of B (no batch pad)
        block_b = 1
    n_steps = B // block_b

    tanh_bf16 = "v5" not in kind            # bf16 EUP tanh only off v5e
    vmem_limit = (40 << 20) if "v7" in kind else (64 << 20)

    kernel = functools.partial(_fusion_kernel, tanh_bf16=tanh_bf16)

    out = pl.pallas_call(
        kernel,
        out_shape=jax.ShapeDtypeStruct((n_steps, block_b, D), jnp.float32),
        grid_spec=pltpu.PrefetchScalarGridSpec(
            num_scalar_prefetch=0,
            grid=(n_steps,),
            in_specs=[
                pl.BlockSpec((block_b, N, D), lambda b: (b, 0, 0)),   # img
                pl.BlockSpec((block_b, N, D), lambda b: (b, 0, 0)),   # spatial
                pl.BlockSpec((block_b, N, D), lambda b: (b, 0, 0)),   # temporal
                pl.BlockSpec((D, H), lambda b: (0, 0)),               # W1^T
                pl.BlockSpec((1, H), lambda b: (0, 0)),               # b1
                pl.BlockSpec((1, H), lambda b: (0, 0)),               # W2 row
            ],
            out_specs=pl.BlockSpec((1, block_b, D), lambda b: (b, 0, 0)),
        ),
        compiler_params=pltpu.CompilerParams(
            dimension_semantics=("parallel",),
            vmem_limit_bytes=vmem_limit,
        ),
    )(img_feats, spatial_feats, temporal_feats, w1, b1, w2_row)

    return out.reshape(B, D)   # (B, D), no padding to strip


def dual_attn_fusion_ref(img_feats, spatial_feats, temporal_feats, w1, b1, w2_row):
    # Pure-JAX reference mirroring the PyTorch forward (per-norm eps clamp).
    eps = 1e-8
    dots = jnp.sum(spatial_feats * img_feats, axis=-1)
    n1 = jnp.linalg.norm(spatial_feats, axis=-1)
    n2 = jnp.linalg.norm(img_feats, axis=-1)
    sim = dots / (jnp.maximum(n1, eps) * jnp.maximum(n2, eps))   # (B, N)
    weighted = sim[..., None] * spatial_feats                    # (B, N, D)
    z = jnp.stack([weighted, temporal_feats], axis=1)            # (B, 2, N, D)
    h = jnp.tanh(jnp.einsum("bvnd,dh->bvnh", z, w1) + b1[0])
    s = jnp.einsum("bvnh,h->bvn", h, w2_row[0])[..., None]       # (B, 2, N, 1)
    w_d = jnp.mean(s, axis=2)                                    # (B, 2, 1)
    beta = jax.nn.softmax(w_d, axis=1)[:, :, None, :]            # (B, 2, 1, 1)
    return jnp.mean(jnp.sum(z * beta, axis=1), axis=1)           # (B, D)


if __name__ == "__main__":
    # module defaults: in_size=48, hidden_size=128; small B, N for the demo.
    B, N, D, H = 2, 8, 48, 128
    key = jax.random.PRNGKey(0)
    k1, k2, k3, k4, k5, k6 = jax.random.split(key, 6)

    img = jax.random.normal(k1, (B, N, D), jnp.float32)
    spa = jax.random.normal(k2, (B, N, D), jnp.float32)
    tmp = jax.random.normal(k3, (B, N, D), jnp.float32)

    # Deterministic init mimicking nn.Linear: U(-1/sqrt(fan_in), 1/sqrt(fan_in)).
    lim1 = 1.0 / (D ** 0.5)
    W1 = jax.random.uniform(k4, (H, D), jnp.float32, -lim1, lim1)   # Linear(D,H).weight
    b1v = jax.random.uniform(k5, (H,), jnp.float32, -lim1, lim1)    # Linear(D,H).bias
    lim2 = 1.0 / (H ** 0.5)
    W2 = jax.random.uniform(k6, (1, H), jnp.float32, -lim2, lim2)   # Linear(H,1,bias=False).weight

    w1 = W1.T                  # (D, H)
    b1 = b1v.reshape(1, H)     # (1, H)
    w2_row = W2                # (1, H) row vector (NOT transposed)

    out = dual_attn_fusion_pallas(img, spa, tmp, w1, b1, w2_row)
    jax.block_until_ready(out)

    ref = dual_attn_fusion_ref(img, spa, tmp, w1, b1, w2_row)
    assert out.shape == (B, D), out.shape
    err = float(jnp.max(jnp.abs(out - ref)))
    assert jnp.allclose(out, ref, atol=2e-3, rtol=2e-3), err
    print("KERNEL_OK")
</pallas_src>

<mosaic_0001>
module attributes {stable_mosaic.version = 11 : i64} {
  func.func @_fusion_kernel(%arg0: i32, %arg1: memref<2x8x48xf32, #tpu.memory_space<vmem>>, %arg2: memref<2x8x48xf32, #tpu.memory_space<vmem>>, %arg3: memref<2x8x48xf32, #tpu.memory_space<vmem>>, %arg4: memref<48x128xf32, #tpu.memory_space<vmem>>, %arg5: memref<1x128xf32, #tpu.memory_space<vmem>>, %arg6: memref<1x128xf32, #tpu.memory_space<vmem>>, %arg7: memref<1x2x48xf32, #tpu.memory_space<vmem>>) attributes {dimension_semantics = [#tpu.dimension_semantics<parallel>], iteration_bounds = array<i64: 1>, scalar_prefetch = 0 : i64, scratch_operands = 0 : i64, tpu.core_type = #tpu.core_type<tc>, window_params = [{transform_indices = @transform_0, window_bounds = array<i64: 2, 8, 48>}, {transform_indices = @transform_1, window_bounds = array<i64: 2, 8, 48>}, {transform_indices = @transform_2, window_bounds = array<i64: 2, 8, 48>}, {pipeline_mode = #tpu.pipeline_mode<synchronous>, transform_indices = @transform_3, window_bounds = array<i64: 48, 128>}, {pipeline_mode = #tpu.pipeline_mode<synchronous>, transform_indices = @transform_4, window_bounds = array<i64: 1, 128>}, {pipeline_mode = #tpu.pipeline_mode<synchronous>, transform_indices = @transform_5, window_bounds = array<i64: 1, 128>}, {transform_indices = @transform_6, window_bounds = array<i64: 1, 2, 48>}]} {
    %c0 = arith.constant 0 : index
    %c0_0 = arith.constant 0 : index
    %c0_1 = arith.constant 0 : index
    %0 = vector.load %arg1[%c0, %c0_0, %c0_1] : memref<2x8x48xf32, #tpu.memory_space<vmem>>, vector<2x8x48xf32>
    %c0_2 = arith.constant 0 : index
    %c0_3 = arith.constant 0 : index
    %c0_4 = arith.constant 0 : index
    %1 = vector.load %arg2[%c0_2, %c0_3, %c0_4] : memref<2x8x48xf32, #tpu.memory_space<vmem>>, vector<2x8x48xf32>
    %c0_5 = arith.constant 0 : index
    %c0_6 = arith.constant 0 : index
    %c0_7 = arith.constant 0 : index
    %2 = vector.load %arg3[%c0_5, %c0_6, %c0_7] : memref<2x8x48xf32, #tpu.memory_space<vmem>>, vector<2x8x48xf32>
    %3 = arith.mulf %1, %0 : vector<2x8x48xf32>
    %cst = arith.constant dense<0.000000e+00> : vector<2x8xf32>
    %4 = vector.multi_reduction <add>, %3, %cst [2] : vector<2x8x48xf32> to vector<2x8xf32>
    %5 = vector.shape_cast %4 : vector<2x8xf32> to vector<2x8x1xf32>
    %6 = arith.mulf %1, %1 : vector<2x8x48xf32>
    %cst_8 = arith.constant dense<0.000000e+00> : vector<2x8xf32>
    %7 = vector.multi_reduction <add>, %6, %cst_8 [2] : vector<2x8x48xf32> to vector<2x8xf32>
    %8 = vector.shape_cast %7 : vector<2x8xf32> to vector<2x8x1xf32>
    %9 = arith.mulf %0, %0 : vector<2x8x48xf32>
    %cst_9 = arith.constant dense<0.000000e+00> : vector<2x8xf32>
    %10 = vector.multi_reduction <add>, %9, %cst_9 [2] : vector<2x8x48xf32> to vector<2x8xf32>
    %11 = vector.shape_cast %10 : vector<2x8xf32> to vector<2x8x1xf32>
    %cst_10 = arith.constant 9.99999993E-9 : f32
    %cst_11 = arith.constant 9.99999993E-9 : f32
    %12 = arith.mulf %cst_10, %cst_11 : f32
    %13 = vector.broadcast %12 : f32 to vector<2x8x1xf32>
    %14 = arith.maximumf %8, %13 : vector<2x8x1xf32>
    %15 = math.rsqrt %14 : vector<2x8x1xf32>
    %cst_12 = arith.constant 9.99999993E-9 : f32
    %cst_13 = arith.constant 9.99999993E-9 : f32
    %16 = arith.mulf %cst_12, %cst_13 : f32
    %17 = vector.broadcast %16 : f32 to vector<2x8x1xf32>
    %18 = arith.maximumf %11, %17 : vector<2x8x1xf32>
    %19 = math.rsqrt %18 : vector<2x8x1xf32>
    %20 = arith.mulf %15, %19 : vector<2x8x1xf32>
    %21 = arith.mulf %5, %20 : vector<2x8x1xf32>
    %22 = vector.broadcast %21 : vector<2x8x1xf32> to vector<2x8x48xf32>
    %23 = arith.mulf %22, %1 : vector<2x8x48xf32>
    %c0_14 = arith.constant 0 : index
    %c0_15 = arith.constant 0 : index
    %24 = vector.load %arg4[%c0_14, %c0_15] : memref<48x128xf32, #tpu.memory_space<vmem>>, vector<48x128xf32>
    %25 = arith.truncf %24 : vector<48x128xf32> to vector<48x128xbf16>
    %c0_16 = arith.constant 0 : index
    %c0_17 = arith.constant 0 : index
    %26 = vector.load %arg5[%c0_16, %c0_17] : memref<1x128xf32, #tpu.memory_space<vmem>>, vector<1x128xf32>
    %27 = vector.shape_cast %23 : vector<2x8x48xf32> to vector<16x48xf32>
    %28 = arith.truncf %27 : vector<16x48xf32> to vector<16x48xbf16>
    %cst_18 = arith.constant dense<0.000000e+00> : vector<16x128xf32>
    %29 = tpu.matmul %28, %25, %cst_18 {dimension_numbers = #tpu.dot_dimension_numbers<[1], [0], [0], [1], [0, 0, 1, 1], [], []>} : vector<16x48xbf16>, vector<48x128xbf16>, vector<16x128xf32> -> vector<16x128xf32>
    %30 = vector.shape_cast %2 : vector<2x8x48xf32> to vector<16x48xf32>
    %31 = arith.truncf %30 : vector<16x48xf32> to vector<16x48xbf16>
    %cst_19 = arith.constant dense<0.000000e+00> : vector<16x128xf32>
    %32 = tpu.matmul %31, %25, %cst_19 {dimension_numbers = #tpu.dot_dimension_numbers<[1], [0], [0], [1], [0, 0, 1, 1], [], []>} : vector<16x48xbf16>, vector<48x128xbf16>, vector<16x128xf32> -> vector<16x128xf32>
    %33 = vector.broadcast %26 : vector<1x128xf32> to vector<16x128xf32>
    %34 = arith.addf %29, %33 : vector<16x128xf32>
    %35 = arith.truncf %34 : vector<16x128xf32> to vector<16x128xbf16>
    %36 = math.tanh %35 : vector<16x128xbf16>
    %37 = arith.extf %36 : vector<16x128xbf16> to vector<16x128xf32>
    %38 = vector.broadcast %26 : vector<1x128xf32> to vector<16x128xf32>
    %39 = arith.addf %32, %38 : vector<16x128xf32>
    %40 = arith.truncf %39 : vector<16x128xf32> to vector<16x128xbf16>
    %41 = math.tanh %40 : vector<16x128xbf16>
    %42 = arith.extf %41 : vector<16x128xbf16> to vector<16x128xf32>
    %c0_20 = arith.constant 0 : index
    %c0_21 = arith.constant 0 : index
    %43 = vector.load %arg6[%c0_20, %c0_21] : memref<1x128xf32, #tpu.memory_space<vmem>>, vector<1x128xf32>
    %44 = vector.shape_cast %37 : vector<16x128xf32> to vector<2x8x128xf32>
    %cst_22 = arith.constant dense<0.000000e+00> : vector<2x128xf32>
    %45 = vector.multi_reduction <add>, %44, %cst_22 [1] : vector<2x8x128xf32> to vector<2x128xf32>
    %cst_23 = arith.constant 8.000000e+00 : f32
    %46 = vector.broadcast %cst_23 : f32 to vector<2x128xf32>
    %47 = arith.divf %45, %46 : vector<2x128xf32>
    %48 = vector.shape_cast %42 : vector<16x128xf32> to vector<2x8x128xf32>
    %cst_24 = arith.constant dense<0.000000e+00> : vector<2x128xf32>
    %49 = vector.multi_reduction <add>, %48, %cst_24 [1] : vector<2x8x128xf32> to vector<2x128xf32>
    %cst_25 = arith.constant 8.000000e+00 : f32
    %50 = vector.broadcast %cst_25 : f32 to vector<2x128xf32>
    %51 = arith.divf %49, %50 : vector<2x128xf32>
    %52 = vector.broadcast %43 : vector<1x128xf32> to vector<2x128xf32>
    %53 = arith.mulf %47, %52 : vector<2x128xf32>
    %cst_26 = arith.constant dense<0.000000e+00> : vector<2xf32>
    %54 = vector.multi_reduction <add>, %53, %cst_26 [1] : vector<2x128xf32> to vector<2xf32>
    %55 = vector.shape_cast %54 : vector<2xf32> to vector<2x1xf32>
    %56 = vector.broadcast %43 : vector<1x128xf32> to vector<2x128xf32>
    %57 = arith.mulf %51, %56 : vector<2x128xf32>
    %cst_27 = arith.constant dense<0.000000e+00> : vector<2xf32>
    %58 = vector.multi_reduction <add>, %57, %cst_27 [1] : vector<2x128xf32> to vector<2xf32>
    %59 = vector.shape_cast %58 : vector<2xf32> to vector<2x1xf32>
    %60 = arith.maximumf %55, %59 : vector<2x1xf32>
    %61 = arith.subf %55, %60 : vector<2x1xf32>
    %62 = math.exp %61 : vector<2x1xf32>
    %63 = arith.subf %59, %60 : vector<2x1xf32>
    %64 = math.exp %63 : vector<2x1xf32>
    %65 = arith.addf %62, %64 : vector<2x1xf32>
    %66 = tpu.reciprocal %65 {approx = true} : vector<2x1xf32> -> vector<2x1xf32>
    %67 = arith.mulf %62, %66 : vector<2x1xf32>
    %68 = arith.mulf %64, %66 : vector<2x1xf32>
    %cst_28 = arith.constant dense<0.000000e+00> : vector<2x48xf32>
    %69 = vector.multi_reduction <add>, %23, %cst_28 [1] : vector<2x8x48xf32> to vector<2x48xf32>
    %cst_29 = arith.constant 8.000000e+00 : f32
    %70 = vector.broadcast %cst_29 : f32 to vector<2x48xf32>
    %71 = arith.divf %69, %70 : vector<2x48xf32>
    %cst_30 = arith.constant dense<0.000000e+00> : vector<2x48xf32>
    %72 = vector.multi_reduction <add>, %2, %cst_30 [1] : vector<2x8x48xf32> to vector<2x48xf32>
    %cst_31 = arith.constant 8.000000e+00 : f32
    %73 = vector.broadcast %cst_31 : f32 to vector<2x48xf32>
    %74 = arith.divf %72, %73 : vector<2x48xf32>
    %75 = vector.broadcast %67 : vector<2x1xf32> to vector<2x48xf32>
    %76 = arith.mulf %75, %71 : vector<2x48xf32>
    %77 = vector.broadcast %68 : vector<2x1xf32> to vector<2x48xf32>
    %78 = arith.mulf %77, %74 : vector<2x48xf32>
    %79 = arith.addf %76, %78 : vector<2x48xf32>
    %80 = vector.shape_cast %79 : vector<2x48xf32> to vector<1x2x48xf32>
    %c0_32 = arith.constant 0 : index
    %c0_33 = arith.constant 0 : index
    %c0_34 = arith.constant 0 : index
    %81 = vector.load %arg7[%c0_32, %c0_33, %c0_34] : memref<1x2x48xf32, #tpu.memory_space<vmem>>, vector<1x2x48xf32>
    tpu.vector_store %arg7[%c0_32, %c0_33, %c0_34], %80 {strides = array<i32>} : memref<1x2x48xf32, #tpu.memory_space<vmem>>, vector<1x2x48xf32>,
    return
  }
  func.func @transform_0(%arg0: i32) -> (i32, i32, i32) {
    %c0_i32 = arith.constant 0 : i32
    %c0_i32_0 = arith.constant 0 : i32
    %c0_i32_1 = arith.constant 0 : i32
    return %arg0, %c0_i32, %c0_i32_0 : i32, i32, i32
  }
  func.func @transform_1(%arg0: i32) -> (i32, i32, i32) {
    %c0_i32 = arith.constant 0 : i32
    %c0_i32_0 = arith.constant 0 : i32
    %c0_i32_1 = arith.constant 0 : i32
    return %arg0, %c0_i32, %c0_i32_0 : i32, i32, i32
  }
  func.func @transform_2(%arg0: i32) -> (i32, i32, i32) {
    %c0_i32 = arith.constant 0 : i32
    %c0_i32_0 = arith.constant 0 : i32
    %c0_i32_1 = arith.constant 0 : i32
    return %arg0, %c0_i32, %c0_i32_0 : i32, i32, i32
  }
  func.func @transform_3(%arg0: i32) -> (i32, i32) {
    %c0_i32 = arith.constant 0 : i32
    %c0_i32_0 = arith.constant 0 : i32
    %c0_i32_1 = arith.constant 0 : i32
    return %c0_i32, %c0_i32_0 : i32, i32
  }
  func.func @transform_4(%arg0: i32) -> (i32, i32) {
    %c0_i32 = arith.constant 0 : i32
    %c0_i32_0 = arith.constant 0 : i32
    %c0_i32_1 = arith.constant 0 : i32
    return %c0_i32, %c0_i32_0 : i32, i32
  }
  func.func @transform_5(%arg0: i32) -> (i32, i32) {
    %c0_i32 = arith.constant 0 : i32
    %c0_i32_0 = arith.constant 0 : i32
    %c0_i32_1 = arith.constant 0 : i32
    return %c0_i32, %c0_i32_0 : i32, i32
  }
  func.func @transform_6(%arg0: i32) -> (i32, i32, i32) {
    %c0_i32 = arith.constant 0 : i32
    %c0_i32_0 = arith.constant 0 : i32
    %c0_i32_1 = arith.constant 0 : i32
    return %arg0, %c0_i32, %c0_i32_0 : i32, i32, i32
  }
}

</mosaic_0001>

<llo_original>
// kernel: tpu_custom_call.1
$region0: #{tpu_custom_call.1}
  #allocation0 [shape = 'u32[]', space=smem, size = 0x4, offset = 0x4, fixed_abs, tag = 'smem constant byte address 0x4 - core index']
  #allocation1 [shape = 'u32[144,128]{1,0:T(1,128)}', space=vmem, size = 0x12000, scoped, tag = 'internal scratch']
  %s0 = inlined_call_operand.hbm [shape: f32[2,8,48], index: 0, kind: input, shape index: {}]
  %s1 = inlined_call_operand.hbm [shape: f32[2,8,48], index: 1, kind: input, shape index: {}]
  %s2 = inlined_call_operand.hbm [shape: f32[2,8,48], index: 2, kind: input, shape index: {}]
  %s3 = inlined_call_operand.hbm [shape: f32[48,128], index: 3, kind: input, shape index: {}]
  %s4 = inlined_call_operand.hbm [shape: f32[1,128], index: 4, kind: input, shape index: {}]
  %s5 = inlined_call_operand.hbm [shape: f32[1,128], index: 5, kind: input, shape index: {}]
  %s6 = inlined_call_operand.hbm [shape: f32[1,2,48], index: 6, kind: output, shape index: {}]
  %s7 = sld [smem:[#allocation0]]
  $region58: #{tpu_custom_call.1} parent=0
    _
  %s9 = ssub.s32 1, %s7
  %s10 = scalar_select 0, %s9, %s7
  $region1: #{tpu_custom_call.1} parent=0
    #allocation2 [shape = 'u8[8192]{0}', space=vmem, size = 0x2000, scoped, tag = 'input window, operand 0, single buffered']
    #allocation3 [shape = 's32[1]{0}', space=sflag, size = 0x4, scoped, tag = 'scoped memory for tpu_custom_call.1']
    #allocation4 [shape = 's32[1]{0}', space=sflag, size = 0x4, scoped, tag = 'scoped memory for tpu_custom_call.1']
    #allocation5 [shape = 'u8[8192]{0}', space=vmem, size = 0x2000, scoped, tag = 'input window, operand 1, single buffered']
    #allocation6 [shape = 's32[1]{0}', space=sflag, size = 0x4, scoped, tag = 'scoped memory for tpu_custom_call.1']
    #allocation7 [shape = 'u8[8192]{0}', space=vmem, size = 0x2000, scoped, tag = 'input window, operand 2, single buffered']
    #allocation8 [shape = 'u8[24576]{0}', space=vmem, size = 0x6000, scoped, tag = 'input window, operand 3, single buffered']
    #allocation9 [shape = 's32[1]{0}', space=sflag, size = 0x4, scoped, tag = 'scoped memory for tpu_custom_call.1']
    #allocation10 [shape = 'u8[512]{0}', space=vmem, size = 0x400, scoped, tag = 'input window, operand 4, single buffered']
    #allocation11 [shape = 'u8[512]{0}', space=vmem, size = 0x400, scoped, tag = 'input window, operand 5, single buffered']
    #allocation12 [shape = 's32[1]{0}', space=sflag, size = 0x4, scoped, tag = 'scoped memory for tpu_custom_call.1']
    #allocation13 [shape = 'u8[1024]{0}', space=vmem, size = 0x400, scoped, tag = 'output window, operand 0, single buffered']
    %11 = vsyncpa [#allocation3], 0
    %12 = vsyncpa [#allocation6], 0
    %13 = vsyncpa [#allocation9], 0
    %14 = vsyncpa [#allocation12], 0
    %15 = vsyncpa [#allocation4], 0
    // Predicated region
    $region2: #{tpu_custom_call.1} parent=1 // pred_check
      _
    $region3: #{tpu_custom_call.1} parent=1 // pred_check_branch
      %17 = sbr.rel (0) target = $region5
    $region4: #{tpu_custom_call.1} parent=1 // pred_region
      %s19 = ssub.s32 256, 256
      %20 = vsyncadd [#allocation3], %s19
      %s21 = sshll.u32 [#allocation2], 4
      %s22 = int_to_ptr.vmem [resolvable:$true] %s21
      %27 = dma.hbm_to_vmem [thread:$0]  %s0, 256, %s22, [#allocation3], 128, 128, 8
    $region5: #{tpu_custom_call.1} parent=1 // pred_fallthru
      _
    // Predicated region
    $region6: #{tpu_custom_call.1} parent=1 // pred_check
      _
    $region7: #{tpu_custom_call.1} parent=1 // pred_check_branch
      %29 = sbr.rel (0) target = $region9
    $region8: #{tpu_custom_call.1} parent=1 // pred_region
      %s31 = ssub.s32 256, 256
      %32 = vsyncadd [#allocation6], %s31
      %s33 = sshll.u32 [#allocation5], 4
      %s34 = int_to_ptr.vmem [resolvable:$true] %s33
      %39 = dma.hbm_to_vmem [thread:$0]  %s1, 256, %s34, [#allocation6], 128, 128, 8
    $region9: #{tpu_custom_call.1} parent=1 // pred_fallthru
      _
    // Predicated region
    $region10: #{tpu_custom_call.1} parent=1 // pred_check
      _
    $region11: #{tpu_custom_call.1} parent=1 // pred_check_branch
      %41 = sbr.rel (0) target = $region13
    $region12: #{tpu_custom_call.1} parent=1 // pred_region
      %s43 = ssub.s32 256, 256
      %44 = vsyncadd [#allocation6], %s43
      %s45 = sshll.u32 [#allocation7], 4
      %s46 = int_to_ptr.vmem [resolvable:$true] %s45
      %51 = dma.hbm_to_vmem [thread:$0]  %s2, 256, %s46, [#allocation6], 128, 128, 8
    $region13: #{tpu_custom_call.1} parent=1 // pred_fallthru
      _
    // Predicated region
    $region14: #{tpu_custom_call.1} parent=1 // pred_check
      _
    $region15: #{tpu_custom_call.1} parent=1 // pred_check_branch
      %53 = sbr.rel (0) target = $region17
    $region16: #{tpu_custom_call.1} parent=1 // pred_region
      %s55 = ssub.s32 768, 768
      %56 = vsyncadd [#allocation9], %s55
      %s57 = sshll.u32 [#allocation8], 4
      %s58 = int_to_ptr.vmem [resolvable:$true] %s57
      %63 = dma.hbm_to_vmem [thread:$0]  %s3, 768, %s58, [#allocation9], 128, 128, 8
    $region17: #{tpu_custom_call.1} parent=1 // pred_fallthru
      _
    // Predicated region
    $region18: #{tpu_custom_call.1} parent=1 // pred_check
      _
    $region19: #{tpu_custom_call.1} parent=1 // pred_check_branch
      %65 = sbr.rel (0) target = $region21
    $region20: #{tpu_custom_call.1} parent=1 // pred_region
      %s67 = ssub.s32 16, 16
      %68 = vsyncadd [#allocation9], %s67
      %s70 = sshll.u32 [#allocation10], 4
      %s71 = int_to_ptr.vmem [resolvable:$true] %s70
      %73 = dma.hbm_to_vmem [thread:$0]  %s4, 16, %s71, [#allocation9]
    $region21: #{tpu_custom_call.1} parent=1 // pred_fallthru
      _
    // Predicated region
    $region22: #{tpu_custom_call.1} parent=1 // pred_check
      _
    $region23: #{tpu_custom_call.1} parent=1 // pred_check_branch
      %75 = sbr.rel (0) target = $region25
    $region24: #{tpu_custom_call.1} parent=1 // pred_region
      %s77 = ssub.s32 16, 16
      %78 = vsyncadd [#allocation12], %s77
      %s80 = sshll.u32 [#allocation11], 4
      %s81 = int_to_ptr.vmem [resolvable:$true] %s80
      %83 = dma.hbm_to_vmem [thread:$0]  %s5, 16, %s81, [#allocation12]
    $region25: #{tpu_custom_call.1} parent=1 // pred_fallthru
      _
    // Predicated region
    $region26: #{tpu_custom_call.1} parent=1 // pred_check
      _
    $region27: #{tpu_custom_call.1} parent=1 // pred_check_branch
      %85 = sbr.rel (0) target = $region29
    $region28: #{tpu_custom_call.1} parent=1 // pred_region
      %86 = dma.done [#allocation3], 256
    $region29: #{tpu_custom_call.1} parent=1 // pred_fallthru
      _
    // Predicated region
    $region30: #{tpu_custom_call.1} parent=1 // pred_check
      _
    $region31: #{tpu_custom_call.1} parent=1 // pred_check_branch
      %88 = sbr.rel (0) target = $region33
    $region32: #{tpu_custom_call.1} parent=1 // pred_region
      %89 = dma.done [#allocation6], 256
    $region33: #{tpu_custom_call.1} parent=1 // pred_fallthru
      _
    // Predicated region
    $region34: #{tpu_custom_call.1} parent=1 // pred_check
      _
    $region35: #{tpu_custom_call.1} parent=1 // pred_check_branch
      %91 = sbr.rel (0) target = $region37
    $region36: #{tpu_custom_call.1} parent=1 // pred_region
      %92 = dma.done [#allocation6], 256
    $region37: #{tpu_custom_call.1} parent=1 // pred_fallthru
      _
    // Predicated region
    $region38: #{tpu_custom_call.1} parent=1 // pred_check
      _
    $region39: #{tpu_custom_call.1} parent=1 // pred_check_branch
      %94 = sbr.rel (0) target = $region41
    $region40: #{tpu_custom_call.1} parent=1 // pred_region
      %95 = dma.done [#allocation9], 768
    $region41: #{tpu_custom_call.1} parent=1 // pred_fallthru
      _
    // Predicated region
    $region42: #{tpu_custom_call.1} parent=1 // pred_check
      _
    $region43: #{tpu_custom_call.1} parent=1 // pred_check_branch
      %97 = sbr.rel (0) target = $region45
    $region44: #{tpu_custom_call.1} parent=1 // pred_region
      %98 = dma.done [#allocation9], 16
    $region45: #{tpu_custom_call.1} parent=1 // pred_fallthru
      _
    // Predicated region
    $region46: #{tpu_custom_call.1} parent=1 // pred_check
      _
    $region47: #{tpu_custom_call.1} parent=1 // pred_check_branch
      %100 = sbr.rel (0) target = $region49
    $region48: #{tpu_custom_call.1} parent=1 // pred_region
      %101 = dma.done [#allocation12], 16
    $region49: #{tpu_custom_call.1} parent=1 // pred_fallthru
      _
    %v103 = vld [vmem:[#allocation2] sm:$0xff]
    %v104 = vld [vmem:[#allocation2 + $0x8] sm:$0xff]
    %v105 = vld [vmem:[#allocation5] sm:$0xff]
    %v106 = vld [vmem:[#allocation5 + $0x8] sm:$0xff]
    %v107 = vld [vmem:[#allocation7] sm:$0xff]
    %v108 = vld [vmem:[#allocation7 + $0x8] sm:$0xff]
    %v109 = vmul.f32 %v105, %v103
    %v110 = vmul.f32 %v106, %v104
    %vm111 = vcmask 392192
    %v112 = vsel %vm111, %v109, 0.0
    %113 = vadd.xlane.f32.xlu0 %v112
    %v114 = vpop.xlane.xlu0 %113
    %v115 = vsel %vm111, %v110, 0.0
    %116 = vadd.xlane.f32.xlu0 %v115
    %v117 = vpop.xlane.xlu0 %116
    %v118 = vmul.f32 %v105, %v105
    %v119 = vmul.f32 %v106, %v106
    %v120 = vsel %vm111, %v118, 0.0
    %121 = vadd.xlane.f32.xlu0 %v120
    %v122 = vpop.xlane.xlu0 %121
    %v123 = vsel %vm111, %v119, 0.0
    %124 = vadd.xlane.f32.xlu0 %v123
    %v125 = vpop.xlane.xlu0 %124
    %v126 = vmul.f32 %v103, %v103
    %v127 = vmul.f32 %v104, %v104
    %v128 = vsel %vm111, %v126, 0.0
    %129 = vadd.xlane.f32.xlu0 %v128
    %v130 = vpop.xlane.xlu0 %129
    %v131 = vsel %vm111, %v127, 0.0
    %132 = vadd.xlane.f32.xlu0 %v131
    %v133 = vpop.xlane.xlu0 %132
    %v134 = vmax.f32 %v122, 1e-16
    %v135 = vmax.f32 %v125, 1e-16
    %v136 = vrsqrt.pop %v134
    %v137 = vrsqrt.pop %v135
    %v138 = vmax.f32 %v130, 1e-16
    %v139 = vmax.f32 %v133, 1e-16
    %v140 = vrsqrt.pop %v138
    %v141 = vrsqrt.pop %v139
    %v142 = vmul.f32 %v136, %v140
    %v143 = vmul.f32 %v137, %v141
    %v144 = vmul.f32 %v114, %v142
    %v145 = vmul.f32 %v117, %v143
    %v146 = vmul.f32 %v144, %v105
    %v147 = vmul.f32 %v145, %v106
    %v148 = vld [vmem:[#allocation8] sm:$0xff]
    %v149 = vld [vmem:[#allocation8 + $0x8] sm:$0xff]
    %v150 = vld [vmem:[#allocation8 + $0x10] sm:$0xff]
    %v151 = vld [vmem:[#allocation8 + $0x18] sm:$0xff]
    %v152 = vld [vmem:[#allocation8 + $0x20] sm:$0xff]
    %v153 = vld [vmem:[#allocation8 + $0x28] sm:$0xff]
    %v154 = vpack.c.bf16 %v149, %v148
    %v155 = vpack.c.bf16 %v151, %v150
    %v156 = vpack.c.bf16 %v153, %v152
    %v157 = vld [vmem:[#allocation10] sm:$0x1]
    %v158 = vpack.c.bf16 %v147, %v146
    %v159 = vpack.c.bf16 %v108, %v107
    %v161 = vlaneseq
    %v162 = vshrl.u32 %v161, 7
    %v163 = vsub.s32 0, %v162
    %v164 = vrot.slane %v157, %v163
    %v167 = vsel %vm111, %v158, 0
    %169 = vmatprep.subr.bf16.mxu0 0
    %170 = vmatpush1.bf16.msra.mxu0 %v154
    %171 = vmatprep.subr.bf16.mxu0 0
    %172 = vmatpush1.bf16.msra.mxu0 %v155
    %173 = vmatprep.subr.bf16.mxu0 0
    %174 = vmatpush1.bf16.msra.mxu0 %v156
    %175 = vmatprep.subr.bf16.mxu0 0
    %176 = vmatpush1.bf16.msra.mxu0 0
    %177 = vmatprep.subr.bf16.mxu0 0
    %178 = vmatpush1.bf16.msra.mxu0 0
    %179 = vmatprep.subr.bf16.mxu0 0
    %180 = vmatpush1.bf16.msra.mxu0 0
    %181 = vmatprep.subr.bf16.mxu0 0
    %182 = vmatpush1.bf16.msra.mxu0 0
    %183 = vmatprep.subr.bf16.mxu0 0
    %184 = vmatpush1.bf16.msra.mxu0 0
    %185 = vmatprep.subr.bf16.mxu0 0
    %186 = vmatpush1.bf16.msra.mxu0 0
    %187 = vmatprep.subr.bf16.mxu0 0
    %188 = vmatpush1.bf16.msra.mxu0 0
    %189 = vmatprep.subr.bf16.mxu0 0
    %190 = vmatpush1.bf16.msra.mxu0 0
    %191 = vmatprep.subr.bf16.mxu0 0
    %192 = vmatpush1.bf16.msra.mxu0 0
    %193 = vmatprep.subr.bf16.mxu0 0
    %194 = vmatpush1.bf16.msra.mxu0 0
    %195 = vmatprep.subr.bf16.mxu0 0
    %196 = vmatpush1.bf16.msra.mxu0 0
    %197 = vmatprep.subr.bf16.mxu0 0
    %198 = vmatpush1.bf16.msra.mxu0 0
    %199 = vmatprep.subr.bf16.mxu0 0
    %200 = vmatpush1.bf16.msra.mxu0 0
    %201 = vmatprep.mubr.bf16.mxu0 0
    %202 = vmatmul.mubr.bf16.gmra.mrb[0].mxu0 %v167
    %v203 = vpop.f32.mrb[0].mxu0
    %v204 = vadd.f32 %v164, %v203
    %v205 = vpop.f32.mrb[0].mxu0
    %v206 = vpop.f32.mrb[0].mxu0
    %v207 = vadd.f32 %v164, %v206
    %v208 = vpop.f32.mrb[0].mxu0
    %209 = vdwg.mxu0
    %v210 = vpack.c.bf16 %v207, %v204
    %v211 = vtanh.bf16.pop %v210
    %v212 = vunpack.c.l.bf16 %v211
    %v213 = vunpack.c.h.bf16 %v211
    %v215 = vsel %vm111, %v159, 0
    %217 = vmatprep.subr.bf16.mxu0 0
    %218 = vmatpush1.bf16.msra.mxu0 %v154
    %219 = vmatprep.subr.bf16.mxu0 0
    %220 = vmatpush1.bf16.msra.mxu0 %v155
    %221 = vmatprep.subr.bf16.mxu0 0
    %222 = vmatpush1.bf16.msra.mxu0 %v156
    %223 = vmatprep.subr.bf16.mxu0 0
    %224 = vmatpush1.bf16.msra.mxu0 0
    %225 = vmatprep.subr.bf16.mxu0 0
    %226 = vmatpush1.bf16.msra.mxu0 0
    %227 = vmatprep.subr.bf16.mxu0 0
    %228 = vmatpush1.bf16.msra.mxu0 0
    %229 = vmatprep.subr.bf16.mxu0 0
    %230 = vmatpush1.bf16.msra.mxu0 0
    %231 = vmatprep.subr.bf16.mxu0 0
    %232 = vmatpush1.bf16.msra.mxu0 0
    %233 = vmatprep.subr.bf16.mxu0 0
    %234 = vmatpush1.bf16.msra.mxu0 0
    %235 = vmatprep.subr.bf16.mxu0 0
    %236 = vmatpush1.bf16.msra.mxu0 0
    %237 = vmatprep.subr.bf16.mxu0 0
    %238 = vmatpush1.bf16.msra.mxu0 0
    %239 = vmatprep.subr.bf16.mxu0 0
    %240 = vmatpush1.bf16.msra.mxu0 0
    %241 = vmatprep.subr.bf16.mxu0 0
    %242 = vmatpush1.bf16.msra.mxu0 0
    %243 = vmatprep.subr.bf16.mxu0 0
    %244 = vmatpush1.bf16.msra.mxu0 0
    %245 = vmatprep.subr.bf16.mxu0 0
    %246 = vmatpush1.bf16.msra.mxu0 0
    %247 = vmatprep.subr.bf16.mxu0 0
    %248 = vmatpush1.bf16.msra.mxu0 0
    %249 = vmatprep.mubr.bf16.mxu0 0
    %250 = vmatmul.mubr.bf16.gmra.mrb[0].mxu0 %v215
    %v251 = vpop.f32.mrb[0].mxu0
    %v252 = vadd.f32 %v164, %v251
    %v253 = vpop.f32.mrb[0].mxu0
    %v254 = vpop.f32.mrb[0].mxu0
    %v255 = vadd.f32 %v164, %v254
    %v256 = vpop.f32.mrb[0].mxu0
    %257 = vdwg.mxu0
    %v258 = vpack.c.bf16 %v255, %v252
    %v259 = vtanh.bf16.pop %v258
    %v260 = vunpack.c.l.bf16 %v259
    %v261 = vunpack.c.h.bf16 %v259
    %v262 = vld [vmem:[#allocation11] sm:$0x1]
    %v263 = vrot.slane %v212, 4
    %v264 = vadd.f32 %v212, %v263
    %v265 = vrot.slane %v264, 2
    %v266 = vadd.f32 %v264, %v265
    %v267 = vrot.slane %v266, 1
    %v268 = vadd.f32 %v266, %v267
    %v269 = vrot.slane %v213, 4
    %v270 = vadd.f32 %v213, %v269
    %v271 = vrot.slane %v270, 2
    %v272 = vadd.f32 %v270, %v271
    %v273 = vrot.slane %v272, 1
    %v274 = vadd.f32 %v272, %v273
    %v275 = vrcp.pop 8.0
    %v276 = vmul.f32 %v268, %v275
    %v277 = vmul.f32 %v274, %v275
    %v278 = vrot.slane %v260, 4
    %v279 = vadd.f32 %v260, %v278
    %v280 = vrot.slane %v279, 2
    %v281 = vadd.f32 %v279, %v280
    %v282 = vrot.slane %v281, 1
    %v283 = vadd.f32 %v281, %v282
    %v284 = vrot.slane %v261, 4
    %v285 = vadd.f32 %v261, %v284
    %v286 = vrot.slane %v285, 2
    %v287 = vadd.f32 %v285, %v286
    %v288 = vrot.slane %v287, 1
    %v289 = vadd.f32 %v287, %v288
    %v290 = vmul.f32 %v283, %v275
    %v291 = vmul.f32 %v289, %v275
    %v293 = vlaneseq
    %v294 = vshrl.u32 %v293, 7
    %v295 = vsub.s32 0, %v294
    %v296 = vrot.slane %v262, %v295
    %v298 = vmul.f32 %v276, %v296
    %v299 = vmul.f32 %v277, %v296
    %v302 = vrot.slane %v299, 7
    %vm303 = vcmask 1041409
    %v304 = vsel %vm303, %v302, %v298
    %vm306 = vcmask 1041408
    %v307 = vsel %vm306, %v304, 0.0
    %308 = vadd.xlane.f32.xlu0 %v307
    %v309 = vpop.xlane.xlu0 %308
    %v310 = vmul.f32 %v290, %v296
    %v311 = vmul.f32 %v291, %v296
    %v314 = vrot.slane %v311, 7
    %v315 = vsel %vm303, %v314, %v310
    %v317 = vsel %vm306, %v315, 0.0
    %318 = vadd.xlane.f32.xlu0 %v317
    %v319 = vpop.xlane.xlu0 %318
    %v320 = vmax.f32 %v309, %v319
    %v321 = vsub.f32 %v309, %v320
    %v322 = vmul.f32 %v321, 1.442695
    %v323 = vpow.pop %v322
    %v324 = vsub.f32 %v319, %v320
    %v325 = vmul.f32 %v324, 1.442695
    %v326 = vpow.pop %v325
    %v327 = vadd.f32 %v323, %v326
    %v328 = vrcp.pop %v327
    %v329 = vmul.f32 %v323, %v328
    %v330 = vmul.f32 %v326, %v328
    %v331 = vsel %vm111, %v146, 0.0
    %v332 = vrot.slane %v331, 4
    %v333 = vadd.f32 %v331, %v332
    %v334 = vrot.slane %v333, 2
    %v335 = vadd.f32 %v333, %v334
    %v336 = vrot.slane %v335, 1
    %v337 = vadd.f32 %v335, %v336
    %v338 = vsel %vm111, %v147, 0.0
    %v339 = vrot.slane %v338, 4
    %v340 = vadd.f32 %v338, %v339
    %v341 = vrot.slane %v340, 2
    %v342 = vadd.f32 %v340, %v341
    %v343 = vrot.slane %v342, 1
    %v344 = vadd.f32 %v342, %v343
    %v345 = vmul.f32 %v337, %v275
    %v346 = vmul.f32 %v344, %v275
    %v347 = vsel %vm111, %v107, 0.0
    %v348 = vrot.slane %v347, 4
    %v349 = vadd.f32 %v347, %v348
    %v350 = vrot.slane %v349, 2
    %v351 = vadd.f32 %v349, %v350
    %v352 = vrot.slane %v351, 1
    %v353 = vadd.f32 %v351, %v352
    %v354 = vsel %vm111, %v108, 0.0
    %v355 = vrot.slane %v354, 4
    %v356 = vadd.f32 %v354, %v355
    %v357 = vrot.slane %v356, 2
    %v358 = vadd.f32 %v356, %v357
    %v359 = vrot.slane %v358, 1
    %v360 = vadd.f32 %v358, %v359
    %v361 = vmul.f32 %v353, %v275
    %v362 = vmul.f32 %v360, %v275
    %v365 = vsel %vm303, %v346, %v345
    %v367 = vmul.f32 %v329, %v365
    %v370 = vsel %vm303, %v362, %v361
    %v372 = vmul.f32 %v330, %v370
    %v373 = vadd.f32 %v367, %v372
    %vm374 = vcmask 386048
    %375 = vst.msk [vmem:[#allocation13] sm:$0x3] %vm374, %v373
    // Predicated region
    $region50: #{tpu_custom_call.1} parent=1 // pred_check
      _
    $region51: #{tpu_custom_call.1} parent=1 // pred_check_branch
      %377 = sbr.rel (0) target = $region53
    $region52: #{tpu_custom_call.1} parent=1 // pred_region
      %s379 = ssub.s32 32, 32
      %380 = vsyncadd [#allocation4], %s379
      %s382 = sshll.u32 [#allocation13], 4
      %s383 = int_to_ptr.vmem [resolvable:$true] %s382
      %385 = dma.vmem_to_hbm [thread:$0]  %s383, 32, %s6, [#allocation4]
    $region53: #{tpu_custom_call.1} parent=1 // pred_fallthru
      _
    // Predicated region
    $region54: #{tpu_custom_call.1} parent=1 // pred_check
      _
    $region55: #{tpu_custom_call.1} parent=1 // pred_check_branch
      %387 = sbr.rel (0) target = $region57
    $region56: #{tpu_custom_call.1} parent=1 // pred_region
      %388 = dma.done [#allocation4], 32
    $region57: #{tpu_custom_call.1} parent=1 // pred_fallthru
      _
    %389 = vsyncpa [#allocation3], 1
    %390 = vsyncpa [#allocation6], 1
    %391 = vsyncpa [#allocation9], 1
    %392 = vsyncpa [#allocation12], 1
    %393 = vsyncpa [#allocation4], 1

</llo_original>
